<compile_context>
chip_gen: v7x
topology: tpu7x:2x2x1
jax: 0.10.0
libtpu: 0.0.40
codegen_flags: <defaults>
</compile_context>

<pallas_src>
import numpy as np
import jax
import jax.numpy as jnp
from jax.experimental import pallas as pl
from jax.experimental.pallas import tpu as pltpu


# ----------------------------- Pallas kernel ------------------------------ #
def cnn1d_kernel(x_ref, w1_ref, c1_ref, w2_ref, c2_ref,
                 fw1_ref, fb1_ref, fw2_ref, fb2_ref, out_ref):
    dt = w1_ref.dtype  # compute dtype (f32 exact path, bf16 perf path)

    # conv1 (banded matmul, BN scale pre-folded) + shift (conv bias+BN) + relu
    h = jnp.dot(x_ref[...], w1_ref[...], preferred_element_type=dt)
    h = jnp.maximum(h + c1_ref[...], 0.0)
    # conv2 + shift + relu
    h = jnp.dot(h, w2_ref[...], preferred_element_type=dt)
    h = jnp.maximum(h + c2_ref[...], 0.0)
    # flatten is a no-op in this layout; fc1 + relu
    h = jnp.dot(h, fw1_ref[...], preferred_element_type=dt)
    h = jnp.maximum(h + fb1_ref[...], 0.0)
    # TODO(synk): dropout(p=0.1) is eval-mode identity here (no train-mode masking).
    # fc2 (weight padded to 128 lanes -> lane-dense, unmasked stores).
    # TODO(synk): fc2 could move to VPU/XLU lane reductions to drop ~25% of MXU pushes.
    out_ref[...] = (jnp.dot(h, fw2_ref[...], preferred_element_type=dt)
                    + fb2_ref[...]).astype(out_ref.dtype)


# ------------------------------ JAX glue ---------------------------------- #
def _round_up(n, m):
    return ((n + m - 1) // m) * m


def conv1d_band_matrix(w, L):
    """Build M of shape (Cin*L, Cout*L) so that x_flat @ M == conv1d(x, w, pad=1)
    flattened with feature index = out_channel*L + t (matches nn.Flatten on NCL)."""
    O, C, K = w.shape
    pad = (K - 1) // 2
    M = np.zeros((C * L, O * L), np.float32)
    for o in range(O):
        for c in range(C):
            for t in range(L):
                for k in range(K):
                    tp = t + k - pad
                    if 0 <= tp < L:
                        M[c * L + tp, o * L + t] = float(w[o, c, k])
    return M


def make_params(key, L=4):
    """Deterministic init mirroring CNN1D.__init__ shapes (PyTorch-style
    uniform(-1/sqrt(fan_in), 1/sqrt(fan_in)) for conv/linear; BN at defaults)."""
    ks = jax.random.split(key, 8)

    def unif(k, shape, fan_in):
        b = 1.0 / np.sqrt(fan_in)
        return jax.random.uniform(k, shape, jnp.float32, -b, b)

    p = {}
    p["conv1_w"] = unif(ks[0], (32, 4, 3), 4 * 3)
    p["conv1_b"] = unif(ks[1], (32,), 4 * 3)
    p["conv2_w"] = unif(ks[2], (64, 32, 3), 32 * 3)
    p["conv2_b"] = unif(ks[3], (64,), 32 * 3)
    p["fc1_w"] = unif(ks[4], (64, 64 * L), 64 * L)
    p["fc1_b"] = unif(ks[5], (64,), 64 * L)
    p["fc2_w"] = unif(ks[6], (2, 64), 64)
    p["fc2_b"] = unif(ks[7], (2,), 64)
    # BatchNorm1d defaults (eval mode): gamma=1, beta=0, mean=0, var=1, eps=1e-5
    for name, ch in (("bn1", 32), ("bn2", 64)):
        p[f"{name}_gamma"] = jnp.ones((ch,), jnp.float32)
        p[f"{name}_beta"] = jnp.zeros((ch,), jnp.float32)
        p[f"{name}_mean"] = jnp.zeros((ch,), jnp.float32)
        p[f"{name}_var"] = jnp.ones((ch,), jnp.float32)
    return p


def pack_kernel_args(p, L=4, eps=1e-5, compute_dtype=jnp.float32, n_out_pad=128):
    """Fold conv bias + eval-mode BN into the banded conv matrices (scale) and a
    per-feature shift; pad fc2 to a lane-dense 128-wide output.  All operands
    (weights AND shifts) are emitted in `compute_dtype` so the in-kernel
    elementwise stages run in that dtype too."""
    def fold(conv_b, gamma, beta, mean, var):
        inv = np.asarray(gamma, np.float64) / np.sqrt(np.asarray(var, np.float64) + eps)
        shift = (np.asarray(conv_b, np.float64) - np.asarray(mean, np.float64)) * inv \
            + np.asarray(beta, np.float64)
        return inv.astype(np.float32), shift.astype(np.float32)

    inv1, shift1 = fold(p["conv1_b"], p["bn1_gamma"], p["bn1_beta"],
                        p["bn1_mean"], p["bn1_var"])
    inv2, shift2 = fold(p["conv2_b"], p["bn2_gamma"], p["bn2_beta"],
                        p["bn2_mean"], p["bn2_var"])

    # banded conv matrices with BN scale folded into columns (col index = o*L + t)
    w1 = conv1d_band_matrix(np.asarray(p["conv1_w"]), L) * np.repeat(inv1, L)[None, :]  # (16, 128)
    w2 = conv1d_band_matrix(np.asarray(p["conv2_w"]), L) * np.repeat(inv2, L)[None, :]  # (128, 256)
    c1 = np.repeat(shift1, L)[None, :].astype(np.float32)                               # (1, 128)
    c2 = np.repeat(shift2, L)[None, :].astype(np.float32)                               # (1, 256)

    fw1 = np.asarray(p["fc1_w"]).T.astype(np.float32)                                   # (256, 64)
    fb1 = np.asarray(p["fc1_b"])[None, :].astype(np.float32)                            # (1, 64)

    # fc2 padded to lane-dense width
    fw2 = np.zeros((64, n_out_pad), np.float32)
    fw2[:, :2] = np.asarray(p["fc2_w"]).T
    fb2 = np.zeros((1, n_out_pad), np.float32)
    fb2[:, :2] = np.asarray(p["fc2_b"])[None, :]

    return tuple(jnp.asarray(a, compute_dtype)
                 for a in (w1, c1, w2, c2, fw1, fb1, fw2, fb2))


def _run_tiles(x_flat, kernel_args, TB, out_dtype):
    """Run the fused kernel over x_flat (N, 16) with N % TB == 0.
    Returns (N, 128) padded logits in out_dtype."""
    N, f_in = x_flat.shape
    n_out_pad = kernel_args[-2].shape[1]
    grid = (N // TB,)

    in_specs = [pl.BlockSpec((TB, f_in), lambda i: (i, 0))]          # walks batch
    in_specs += [pl.BlockSpec(a.shape, lambda i: (0, 0))             # VMEM-resident
                 for a in kernel_args]
    out_specs = pl.BlockSpec((TB, n_out_pad), lambda i: (i, 0))

    dsize = x_flat.dtype.itemsize
    odsize = jnp.dtype(out_dtype).itemsize
    weight_bytes = sum(int(np.prod(a.shape)) * a.dtype.itemsize for a in kernel_args)
    cost = pl.CostEstimate(
        flops=2 * N * (16 * 128 + 128 * 256 + 256 * 64 + 64 * n_out_pad),
        transcendentals=0,
        bytes_accessed=int(N * (f_in * dsize + n_out_pad * odsize) + weight_bytes),
    )

    return pl.pallas_call(
        cnn1d_kernel,
        out_shape=jax.ShapeDtypeStruct((N, n_out_pad), out_dtype),
        grid=grid,
        in_specs=in_specs,
        out_specs=out_specs,
        compiler_params=pltpu.CompilerParams(
            dimension_semantics=("parallel",),        # batch tiles shard across v7x TCs
            vmem_limit_bytes=32 * 1024 * 1024,        # explicit: v5e scoped default is 16 MiB
        ),
        cost_estimate=cost,
    )(x_flat, *kernel_args)


def cnn1d_forward(x, kernel_args, *, tb=2048):
    """x: (B, 4, 4) NCL input. Returns (B, 2) logits (f32)."""
    B = x.shape[0]
    compute_dtype = kernel_args[0].dtype
    out_dtype = compute_dtype                  # bf16 perf path -> bf16 writeback (half traffic)
    x_flat = x.reshape(B, -1).astype(compute_dtype)      # (B, 16), feature = c*L + t

    # Pad batch only to a sublane multiple (decoupled from TB).
    B16 = _round_up(B, 16)
    if B16 != B:
        x_flat = jnp.pad(x_flat, ((0, B16 - B), (0, 0)))

    # Tile choice: big tiles amortize the ~600-cycle grid-step overhead; cap at
    # 2048 so intermediates + double-buffered blocks fit comfortably in VMEM on
    # every generation; prefer >= 2 grid steps for large batches (v7x megacore).
    TB = min(int(tb), 2048, B16)
    if B16 > 512 and B16 % 32 == 0:
        TB = min(TB, B16 // 2)

    n_full = (B16 // TB) * TB
    rem = B16 - n_full                          # multiple of 16
    outs = []
    if n_full:
        outs.append(_run_tiles(x_flat[:n_full], kernel_args, TB, out_dtype))
    if rem:
        outs.append(_run_tiles(x_flat[n_full:], kernel_args, rem, out_dtype))
    out = outs[0] if len(outs) == 1 else jnp.concatenate(outs, axis=0)
    return out[:B, :2].astype(jnp.float32)


# ------------------------- pure-JAX reference ------------------------------ #
def ref_forward(x, p, eps=1e-5):
    def conv1d(h, w, b):
        y = jax.lax.conv_general_dilated(
            h, w, window_strides=(1,), padding=((1, 1),),
            dimension_numbers=("NCH", "OIH", "NCH"))
        return y + b[None, :, None]

    def bn_eval(h, g, be, m, v):
        return (h - m[None, :, None]) / jnp.sqrt(v[None, :, None] + eps) \
            * g[None, :, None] + be[None, :, None]

    h = jnp.maximum(bn_eval(conv1d(x, p["conv1_w"], p["conv1_b"]),
                            p["bn1_gamma"], p["bn1_beta"], p["bn1_mean"], p["bn1_var"]), 0.0)
    h = jnp.maximum(bn_eval(conv1d(h, p["conv2_w"], p["conv2_b"]),
                            p["bn2_gamma"], p["bn2_beta"], p["bn2_mean"], p["bn2_var"]), 0.0)
    h = h.reshape(h.shape[0], -1)
    h = jnp.maximum(h @ p["fc1_w"].T + p["fc1_b"], 0.0)
    return h @ p["fc2_w"].T + p["fc2_b"]


# --------------------------------- main ------------------------------------ #
if __name__ == "__main__":
    C, L = 4, 4
    key = jax.random.PRNGKey(0)
    kx, kp, kx2 = jax.random.split(key, 3)
    params = make_params(kp, L=L)

    # --- small batch (matches module's tiny-input usage), f32 compute path ---
    B = 2
    x = jax.random.normal(kx, (B, C, L), jnp.float32)    # NCL, like PyTorch Conv1d input
    ref = jax.block_until_ready(ref_forward(x, params))

    kargs_f32 = pack_kernel_args(params, L=L, compute_dtype=jnp.float32)
    out_f32 = jax.block_until_ready(cnn1d_forward(x, kargs_f32))
    assert out_f32.shape == (B, 2)
    # tolerance allows for the MXU's default (sub-f32) matmul precision
    assert np.allclose(np.asarray(out_f32), np.asarray(ref), rtol=2e-2, atol=2e-2)

    # --- small batch, bf16 perf path (bf16 matmuls/elementwise/writeback) ---
    kargs_bf16 = pack_kernel_args(params, L=L, compute_dtype=jnp.bfloat16)
    out_bf16 = jax.block_until_ready(cnn1d_forward(x, kargs_bf16))
    assert out_bf16.shape == (B, 2)
    assert np.allclose(np.asarray(out_bf16), np.asarray(ref), rtol=7.5e-2, atol=7.5e-2)

    # --- larger batch: exercises TB=2048 tiles, grid>=2 (megacore) and the
    #     decoupled remainder call (B=4200 -> 2 full tiles + 112-row remainder) ---
    B2 = 4200
    x2 = jax.random.normal(kx2, (B2, C, L), jnp.float32)
    ref2 = jax.block_until_ready(ref_forward(x2, params))
    out2 = jax.block_until_ready(cnn1d_forward(x2, kargs_bf16))
    assert out2.shape == (B2, 2)
    assert np.allclose(np.asarray(out2), np.asarray(ref2), rtol=7.5e-2, atol=7.5e-2)

    print("KERNEL_OK")
</pallas_src>

<mosaic_0001>
module attributes {stable_mosaic.version = 11 : i64} {
  func.func @cnn1d_kernel(%arg0: i32, %arg1: memref<16x16xf32, #tpu.memory_space<vmem>>, %arg2: memref<16x128xf32, #tpu.memory_space<vmem>>, %arg3: memref<1x128xf32, #tpu.memory_space<vmem>>, %arg4: memref<128x256xf32, #tpu.memory_space<vmem>>, %arg5: memref<1x256xf32, #tpu.memory_space<vmem>>, %arg6: memref<256x64xf32, #tpu.memory_space<vmem>>, %arg7: memref<1x64xf32, #tpu.memory_space<vmem>>, %arg8: memref<64x128xf32, #tpu.memory_space<vmem>>, %arg9: memref<1x128xf32, #tpu.memory_space<vmem>>, %arg10: memref<16x128xf32, #tpu.memory_space<vmem>>) attributes {dimension_semantics = [#tpu.dimension_semantics<parallel>], iteration_bounds = array<i64: 1>, scalar_prefetch = 0 : i64, scratch_operands = 0 : i64, tpu.core_type = #tpu.core_type<tc>, window_params = [{transform_indices = @transform_0, window_bounds = array<i64: 16, 16>}, {pipeline_mode = #tpu.pipeline_mode<synchronous>, transform_indices = @transform_1, window_bounds = array<i64: 16, 128>}, {pipeline_mode = #tpu.pipeline_mode<synchronous>, transform_indices = @transform_2, window_bounds = array<i64: 1, 128>}, {pipeline_mode = #tpu.pipeline_mode<synchronous>, transform_indices = @transform_3, window_bounds = array<i64: 128, 256>}, {pipeline_mode = #tpu.pipeline_mode<synchronous>, transform_indices = @transform_4, window_bounds = array<i64: 1, 256>}, {pipeline_mode = #tpu.pipeline_mode<synchronous>, transform_indices = @transform_5, window_bounds = array<i64: 256, 64>}, {pipeline_mode = #tpu.pipeline_mode<synchronous>, transform_indices = @transform_6, window_bounds = array<i64: 1, 64>}, {pipeline_mode = #tpu.pipeline_mode<synchronous>, transform_indices = @transform_7, window_bounds = array<i64: 64, 128>}, {pipeline_mode = #tpu.pipeline_mode<synchronous>, transform_indices = @transform_8, window_bounds = array<i64: 1, 128>}, {transform_indices = @transform_9, window_bounds = array<i64: 16, 128>}]} {
    %c0 = arith.constant 0 : index
    %c0_0 = arith.constant 0 : index
    %0 = vector.load %arg1[%c0, %c0_0] : memref<16x16xf32, #tpu.memory_space<vmem>>, vector<16x16xf32>
    %c0_1 = arith.constant 0 : index
    %c0_2 = arith.constant 0 : index
    %1 = vector.load %arg2[%c0_1, %c0_2] : memref<16x128xf32, #tpu.memory_space<vmem>>, vector<16x128xf32>
    %cst = arith.constant dense<0.000000e+00> : vector<16x128xf32>
    %2 = tpu.matmul %0, %1, %cst {dimension_numbers = #tpu.dot_dimension_numbers<[1], [0], [0], [1], [0, 0, 1, 1], [], []>} : vector<16x16xf32>, vector<16x128xf32>, vector<16x128xf32> -> vector<16x128xf32>
    %c0_3 = arith.constant 0 : index
    %c0_4 = arith.constant 0 : index
    %3 = vector.load %arg3[%c0_3, %c0_4] : memref<1x128xf32, #tpu.memory_space<vmem>>, vector<1x128xf32>
    %4 = vector.broadcast %3 : vector<1x128xf32> to vector<16x128xf32>
    %5 = arith.addf %2, %4 : vector<16x128xf32>
    %cst_5 = arith.constant 0.000000e+00 : f32
    %6 = vector.broadcast %cst_5 : f32 to vector<16x128xf32>
    %7 = arith.maximumf %5, %6 : vector<16x128xf32>
    %c0_6 = arith.constant 0 : index
    %c0_7 = arith.constant 0 : index
    %8 = vector.load %arg4[%c0_6, %c0_7] : memref<128x256xf32, #tpu.memory_space<vmem>>, vector<128x256xf32>
    %cst_8 = arith.constant dense<0.000000e+00> : vector<16x256xf32>
    %9 = tpu.matmul %7, %8, %cst_8 {dimension_numbers = #tpu.dot_dimension_numbers<[1], [0], [0], [1], [0, 0, 1, 1], [], []>} : vector<16x128xf32>, vector<128x256xf32>, vector<16x256xf32> -> vector<16x256xf32>
    %c0_9 = arith.constant 0 : index
    %c0_10 = arith.constant 0 : index
    %10 = vector.load %arg5[%c0_9, %c0_10] : memref<1x256xf32, #tpu.memory_space<vmem>>, vector<1x256xf32>
    %11 = vector.broadcast %10 : vector<1x256xf32> to vector<16x256xf32>
    %12 = arith.addf %9, %11 : vector<16x256xf32>
    %cst_11 = arith.constant 0.000000e+00 : f32
    %13 = vector.broadcast %cst_11 : f32 to vector<16x256xf32>
    %14 = arith.maximumf %12, %13 : vector<16x256xf32>
    %c0_12 = arith.constant 0 : index
    %c0_13 = arith.constant 0 : index
    %15 = vector.load %arg6[%c0_12, %c0_13] : memref<256x64xf32, #tpu.memory_space<vmem>>, vector<256x64xf32>
    %cst_14 = arith.constant dense<0.000000e+00> : vector<16x64xf32>
    %16 = tpu.matmul %14, %15, %cst_14 {dimension_numbers = #tpu.dot_dimension_numbers<[1], [0], [0], [1], [0, 0, 1, 1], [], []>} : vector<16x256xf32>, vector<256x64xf32>, vector<16x64xf32> -> vector<16x64xf32>
    %c0_15 = arith.constant 0 : index
    %c0_16 = arith.constant 0 : index
    %17 = vector.load %arg7[%c0_15, %c0_16] : memref<1x64xf32, #tpu.memory_space<vmem>>, vector<1x64xf32>
    %18 = vector.broadcast %17 : vector<1x64xf32> to vector<16x64xf32>
    %19 = arith.addf %16, %18 : vector<16x64xf32>
    %cst_17 = arith.constant 0.000000e+00 : f32
    %20 = vector.broadcast %cst_17 : f32 to vector<16x64xf32>
    %21 = arith.maximumf %19, %20 : vector<16x64xf32>
    %c0_18 = arith.constant 0 : index
    %c0_19 = arith.constant 0 : index
    %22 = vector.load %arg8[%c0_18, %c0_19] : memref<64x128xf32, #tpu.memory_space<vmem>>, vector<64x128xf32>
    %cst_20 = arith.constant dense<0.000000e+00> : vector<16x128xf32>
    %23 = tpu.matmul %21, %22, %cst_20 {dimension_numbers = #tpu.dot_dimension_numbers<[1], [0], [0], [1], [0, 0, 1, 1], [], []>} : vector<16x64xf32>, vector<64x128xf32>, vector<16x128xf32> -> vector<16x128xf32>
    %c0_21 = arith.constant 0 : index
    %c0_22 = arith.constant 0 : index
    %24 = vector.load %arg9[%c0_21, %c0_22] : memref<1x128xf32, #tpu.memory_space<vmem>>, vector<1x128xf32>
    %25 = vector.broadcast %24 : vector<1x128xf32> to vector<16x128xf32>
    %26 = arith.addf %23, %25 : vector<16x128xf32>
    %c0_23 = arith.constant 0 : index
    %c0_24 = arith.constant 0 : index
    %27 = vector.load %arg10[%c0_23, %c0_24] : memref<16x128xf32, #tpu.memory_space<vmem>>, vector<16x128xf32>
    tpu.vector_store %arg10[%c0_23, %c0_24], %26 {strides = array<i32>} : memref<16x128xf32, #tpu.memory_space<vmem>>, vector<16x128xf32>,
    return
  }
  func.func @transform_0(%arg0: i32) -> (i32, i32) {
    %c0_i32 = arith.constant 0 : i32
    %c0_i32_0 = arith.constant 0 : i32
    return %arg0, %c0_i32 : i32, i32
  }
  func.func @transform_1(%arg0: i32) -> (i32, i32) {
    %c0_i32 = arith.constant 0 : i32
    %c0_i32_0 = arith.constant 0 : i32
    %c0_i32_1 = arith.constant 0 : i32
    return %c0_i32, %c0_i32_0 : i32, i32
  }
  func.func @transform_2(%arg0: i32) -> (i32, i32) {
    %c0_i32 = arith.constant 0 : i32
    %c0_i32_0 = arith.constant 0 : i32
    %c0_i32_1 = arith.constant 0 : i32
    return %c0_i32, %c0_i32_0 : i32, i32
  }
  func.func @transform_3(%arg0: i32) -> (i32, i32) {
    %c0_i32 = arith.constant 0 : i32
    %c0_i32_0 = arith.constant 0 : i32
    %c0_i32_1 = arith.constant 0 : i32
    return %c0_i32, %c0_i32_0 : i32, i32
  }
  func.func @transform_4(%arg0: i32) -> (i32, i32) {
    %c0_i32 = arith.constant 0 : i32
    %c0_i32_0 = arith.constant 0 : i32
    %c0_i32_1 = arith.constant 0 : i32
    return %c0_i32, %c0_i32_0 : i32, i32
  }
  func.func @transform_5(%arg0: i32) -> (i32, i32) {
    %c0_i32 = arith.constant 0 : i32
    %c0_i32_0 = arith.constant 0 : i32
    %c0_i32_1 = arith.constant 0 : i32
    return %c0_i32, %c0_i32_0 : i32, i32
  }
  func.func @transform_6(%arg0: i32) -> (i32, i32) {
    %c0_i32 = arith.constant 0 : i32
    %c0_i32_0 = arith.constant 0 : i32
    %c0_i32_1 = arith.constant 0 : i32
    return %c0_i32, %c0_i32_0 : i32, i32
  }
  func.func @transform_7(%arg0: i32) -> (i32, i32) {
    %c0_i32 = arith.constant 0 : i32
    %c0_i32_0 = arith.constant 0 : i32
    %c0_i32_1 = arith.constant 0 : i32
    return %c0_i32, %c0_i32_0 : i32, i32
  }
  func.func @transform_8(%arg0: i32) -> (i32, i32) {
    %c0_i32 = arith.constant 0 : i32
    %c0_i32_0 = arith.constant 0 : i32
    %c0_i32_1 = arith.constant 0 : i32
    return %c0_i32, %c0_i32_0 : i32, i32
  }
  func.func @transform_9(%arg0: i32) -> (i32, i32) {
    %c0_i32 = arith.constant 0 : i32
    %c0_i32_0 = arith.constant 0 : i32
    return %arg0, %c0_i32 : i32, i32
  }
}

</mosaic_0001>

<llo_original>
// kernel: tpu_custom_call.1
$region0: #{tpu_custom_call.1}
  #allocation0 [shape = 'u32[]', space=smem, size = 0x4, offset = 0x4, fixed_abs, tag = 'smem constant byte address 0x4 - core index']
  #allocation1 [shape = 'u32[144,128]{1,0:T(1,128)}', space=vmem, size = 0x12000, scoped, tag = 'internal scratch']
  %s0 = inlined_call_operand.vmem [shape: f32[16,16], index: 0, kind: input, shape index: {}]
  %s1 = inlined_call_operand.vmem [shape: f32[16,128], index: 1, kind: input, shape index: {}]
  %s2 = inlined_call_operand.vmem [shape: f32[1,128], index: 2, kind: input, shape index: {}]
  %s3 = inlined_call_operand.vmem [shape: f32[128,256], index: 3, kind: input, shape index: {}]
  %s4 = inlined_call_operand.vmem [shape: f32[1,256], index: 4, kind: input, shape index: {}]
  %s5 = inlined_call_operand.vmem [shape: f32[256,64], index: 5, kind: input, shape index: {}]
  %s6 = inlined_call_operand.vmem [shape: f32[1,64], index: 6, kind: input, shape index: {}]
  %s7 = inlined_call_operand.vmem [shape: f32[64,128], index: 7, kind: input, shape index: {}]
  %s8 = inlined_call_operand.vmem [shape: f32[1,128], index: 8, kind: input, shape index: {}]
  %s9 = inlined_call_operand.hbm [shape: f32[16,128], index: 9, kind: output, shape index: {}]
  %s10 = sld [smem:[#allocation0]]
  $region46: #{tpu_custom_call.1} parent=0
    _
  %s12 = ssub.s32 1, %s10
  %s13 = scalar_select 0, %s12, %s10
  $region1: #{tpu_custom_call.1} parent=0
    #allocation2 [shape = 'u8[8192]{0}', space=vmem, size = 0x2000, scoped, tag = 'output window, operand 0, single buffered']
    #allocation3 [shape = 's32[1]{0}', space=sflag, size = 0x4, scoped, tag = 'scoped memory for tpu_custom_call.1']
    %14 = vsyncpa [#allocation3], 0
    // Predicated region
    $region2: #{tpu_custom_call.1} parent=1 // pred_check
      _
    $region3: #{tpu_custom_call.1} parent=1 // pred_check_branch
      %16 = sbr.rel (0) target = $region5
    $region4: #{tpu_custom_call.1} parent=1 // pred_region
      _
    $region5: #{tpu_custom_call.1} parent=1 // pred_fallthru
      _
    // Predicated region
    $region6: #{tpu_custom_call.1} parent=1 // pred_check
      _
    $region7: #{tpu_custom_call.1} parent=1 // pred_check_branch
      %18 = sbr.rel (0) target = $region9
    $region8: #{tpu_custom_call.1} parent=1 // pred_region
      _
    $region9: #{tpu_custom_call.1} parent=1 // pred_fallthru
      _
    // Predicated region
    $region10: #{tpu_custom_call.1} parent=1 // pred_check
      _
    $region11: #{tpu_custom_call.1} parent=1 // pred_check_branch
      %20 = sbr.rel (0) target = $region13
    $region12: #{tpu_custom_call.1} parent=1 // pred_region
      _
    $region13: #{tpu_custom_call.1} parent=1 // pred_fallthru
      _
    // Predicated region
    $region14: #{tpu_custom_call.1} parent=1 // pred_check
      _
    $region15: #{tpu_custom_call.1} parent=1 // pred_check_branch
      %22 = sbr.rel (0) target = $region17
    $region16: #{tpu_custom_call.1} parent=1 // pred_region
      _
    $region17: #{tpu_custom_call.1} parent=1 // pred_fallthru
      _
    // Predicated region
    $region18: #{tpu_custom_call.1} parent=1 // pred_check
      _
    $region19: #{tpu_custom_call.1} parent=1 // pred_check_branch
      %24 = sbr.rel (0) target = $region21
    $region20: #{tpu_custom_call.1} parent=1 // pred_region
      _
    $region21: #{tpu_custom_call.1} parent=1 // pred_fallthru
      _
    // Predicated region
    $region22: #{tpu_custom_call.1} parent=1 // pred_check
      _
    $region23: #{tpu_custom_call.1} parent=1 // pred_check_branch
      %26 = sbr.rel (0) target = $region25
    $region24: #{tpu_custom_call.1} parent=1 // pred_region
      _
    $region25: #{tpu_custom_call.1} parent=1 // pred_fallthru
      _
    // Predicated region
    $region26: #{tpu_custom_call.1} parent=1 // pred_check
      _
    $region27: #{tpu_custom_call.1} parent=1 // pred_check_branch
      %28 = sbr.rel (0) target = $region29
    $region28: #{tpu_custom_call.1} parent=1 // pred_region
      _
    $region29: #{tpu_custom_call.1} parent=1 // pred_fallthru
      _
    // Predicated region
    $region30: #{tpu_custom_call.1} parent=1 // pred_check
      _
    $region31: #{tpu_custom_call.1} parent=1 // pred_check_branch
      %30 = sbr.rel (0) target = $region33
    $region32: #{tpu_custom_call.1} parent=1 // pred_region
      _
    $region33: #{tpu_custom_call.1} parent=1 // pred_fallthru
      _
    // Predicated region
    $region34: #{tpu_custom_call.1} parent=1 // pred_check
      _
    $region35: #{tpu_custom_call.1} parent=1 // pred_check_branch
      %32 = sbr.rel (0) target = $region37
    $region36: #{tpu_custom_call.1} parent=1 // pred_region
      _
    $region37: #{tpu_custom_call.1} parent=1 // pred_fallthru
      _
    %v33 = vld [vmem:[%s0] sm:$0xff]
    %v34 = vld [vmem:[%s0 + $0x8] sm:$0xff]
    %v35 = vld [vmem:[%s1] sm:$0xff]
    %v36 = vld [vmem:[%s1 + $0x8] sm:$0xff]
    %v37 = vld [vmem:[%s2] sm:$0x1]
    %v39 = vlaneseq
    %v40 = vshrl.u32 %v39, 7
    %v41 = vsub.s32 0, %v40
    %v42 = vrot.slane %v37, %v41
    %vm44 = vcmask 130048
    %v46 = vsel %vm44, %v33, 0
    %v49 = vsel %vm44, %v34, 0
    %51 = vmatprep.subr.mxu0 0.0
    %52 = vmatpush1.msra.mxu0 %v35
    %53 = vmatprep.subr.mxu0 0.0
    %54 = vmatpush1.msra.mxu0 %v36
    %55 = vmatprep.subr.mxu0 0.0
    %56 = vmatpush1.msra.mxu0 0.0
    %57 = vmatprep.subr.mxu0 0.0
    %58 = vmatpush1.msra.mxu0 0.0
    %59 = vmatprep.subr.mxu0 0.0
    %60 = vmatpush1.msra.mxu0 0.0
    %61 = vmatprep.subr.mxu0 0.0
    %62 = vmatpush1.msra.mxu0 0.0
    %63 = vmatprep.subr.mxu0 0.0
    %64 = vmatpush1.msra.mxu0 0.0
    %65 = vmatprep.subr.mxu0 0.0
    %66 = vmatpush1.msra.mxu0 0.0
    %67 = vmatprep.subr.mxu0 0.0
    %68 = vmatpush1.msra.mxu0 0.0
    %69 = vmatprep.subr.mxu0 0.0
    %70 = vmatpush1.msra.mxu0 0.0
    %71 = vmatprep.subr.mxu0 0.0
    %72 = vmatpush1.msra.mxu0 0.0
    %73 = vmatprep.subr.mxu0 0.0
    %74 = vmatpush1.msra.mxu0 0.0
    %75 = vmatprep.subr.mxu0 0.0
    %76 = vmatpush1.msra.mxu0 0.0
    %77 = vmatprep.subr.mxu0 0.0
    %78 = vmatpush1.msra.mxu0 0.0
    %79 = vmatprep.subr.mxu0 0.0
    %80 = vmatpush1.msra.mxu0 0.0
    %81 = vmatprep.subr.mxu0 0.0
    %82 = vmatpush1.msra.mxu0 0.0
    %83 = vmatprep.subr.mxu0 0.0
    %84 = vmatpush1.msra.mxu0 0.0
    %85 = vmatprep.subr.mxu0 0.0
    %86 = vmatpush1.msra.mxu0 0.0
    %87 = vmatprep.subr.mxu0 0.0
    %88 = vmatpush1.msra.mxu0 0.0
    %89 = vmatprep.subr.mxu0 0.0
    %90 = vmatpush1.msra.mxu0 0.0
    %91 = vmatprep.subr.mxu0 0.0
    %92 = vmatpush1.msra.mxu0 0.0
    %93 = vmatprep.subr.mxu0 0.0
    %94 = vmatpush1.msra.mxu0 0.0
    %95 = vmatprep.subr.mxu0 0.0
    %96 = vmatpush1.msra.mxu0 0.0
    %97 = vmatprep.subr.mxu0 0.0
    %98 = vmatpush1.msra.mxu0 0.0
    %99 = vmatprep.subr.mxu0 0.0
    %100 = vmatpush1.msra.mxu0 0.0
    %101 = vmatprep.subr.mxu0 0.0
    %102 = vmatpush1.msra.mxu0 0.0
    %103 = vmatprep.subr.mxu0 0.0
    %104 = vmatpush1.msra.mxu0 0.0
    %105 = vmatprep.subr.mxu0 0.0
    %106 = vmatpush1.msra.mxu0 0.0
    %107 = vmatprep.subr.mxu0 0.0
    %108 = vmatpush1.msra.mxu0 0.0
    %109 = vmatprep.subr.mxu0 0.0
    %110 = vmatpush1.msra.mxu0 0.0
    %111 = vmatprep.subr.mxu0 0.0
    %112 = vmatpush1.msra.mxu0 0.0
    %113 = vmatprep.subr.mxu0 0.0
    %114 = vmatpush1.msra.mxu0 0.0
    %115 = vmatprep.mubr.f32.mxu0 0.0
    %116 = vmatmul.mubr.f32.gmra.mrb[0].mxu0 %v46
    %v117 = vpop.f32.mrb[0].mxu0
    %v118 = vadd.f32 %v42, %v117
    %v119 = vpop.f32.mrb[0].mxu0
    %120 = vmatprep.mubr.f32.mxu0 0.0
    %121 = vmatmul.mubr.f32.gmra.mrb[0].mxu0 %v49
    %v122 = vpop.f32.mrb[0].mxu0
    %v123 = vadd.f32 %v42, %v122
    %v124 = vpop.f32.mrb[0].mxu0
    %125 = vdwg.mxu0
    %v126 = vmax.f32 %v118, 0.0
    %v127 = vmax.f32 %v123, 0.0
    %v128 = vld [vmem:[%s3] sm:$0xff]
    %v129 = vld [vmem:[%s3 + $0x8] sm:$0xff]
    %v130 = vld [vmem:[%s3 + $0x10] sm:$0xff]
    %v131 = vld [vmem:[%s3 + $0x18] sm:$0xff]
    %v132 = vld [vmem:[%s3 + $0x20] sm:$0xff]
    %v133 = vld [vmem:[%s3 + $0x28] sm:$0xff]
    %v134 = vld [vmem:[%s3 + $0x30] sm:$0xff]
    %v135 = vld [vmem:[%s3 + $0x38] sm:$0xff]
    %v136 = vld [vmem:[%s3 + $0x40] sm:$0xff]
    %v137 = vld [vmem:[%s3 + $0x48] sm:$0xff]
    %v138 = vld [vmem:[%s3 + $0x50] sm:$0xff]
    %v139 = vld [vmem:[%s3 + $0x58] sm:$0xff]
    %v140 = vld [vmem:[%s3 + $0x60] sm:$0xff]
    %v141 = vld [vmem:[%s3 + $0x68] sm:$0xff]
    %v142 = vld [vmem:[%s3 + $0x70] sm:$0xff]
    %v143 = vld [vmem:[%s3 + $0x78] sm:$0xff]
    %v144 = vld [vmem:[%s3 + $0x80] sm:$0xff]
    %v145 = vld [vmem:[%s3 + $0x88] sm:$0xff]
    %v146 = vld [vmem:[%s3 + $0x90] sm:$0xff]
    %v147 = vld [vmem:[%s3 + $0x98] sm:$0xff]
    %v148 = vld [vmem:[%s3 + $0xa0] sm:$0xff]
    %v149 = vld [vmem:[%s3 + $0xa8] sm:$0xff]
    %v150 = vld [vmem:[%s3 + $0xb0] sm:$0xff]
    %v151 = vld [vmem:[%s3 + $0xb8] sm:$0xff]
    %v152 = vld [vmem:[%s3 + $0xc0] sm:$0xff]
    %v153 = vld [vmem:[%s3 + $0xc8] sm:$0xff]
    %v154 = vld [vmem:[%s3 + $0xd0] sm:$0xff]
    %v155 = vld [vmem:[%s3 + $0xd8] sm:$0xff]
    %v156 = vld [vmem:[%s3 + $0xe0] sm:$0xff]
    %v157 = vld [vmem:[%s3 + $0xe8] sm:$0xff]
    %v158 = vld [vmem:[%s3 + $0xf0] sm:$0xff]
    %v159 = vld [vmem:[%s3 + $0xf8] sm:$0xff]
    %v160 = vld [vmem:[%s4] sm:$0x3]
    %v162 = vlaneseq
    %v163 = vshrl.u32 %v162, 7
    %v164 = vsub.s32 0, %v163
    %v165 = vrot.slane %v160, %v164
    %v166 = vlaneseq
    %v167 = vshrl.u32 %v166, 7
    %v168 = vsub.s32 1, %v167
    %v169 = vrot.slane %v160, %v168
    %172 = vmatprep.subr.mxu0 %v129
    %173 = vmatpush1.msra.mxu0 %v128
    %174 = vmatprep.subr.mxu0 %v131
    %175 = vmatpush1.msra.mxu0 %v130
    %176 = vmatprep.subr.mxu0 %v133
    %177 = vmatpush1.msra.mxu0 %v132
    %178 = vmatprep.subr.mxu0 %v135
    %179 = vmatpush1.msra.mxu0 %v134
    %180 = vmatprep.subr.mxu0 %v137
    %181 = vmatpush1.msra.mxu0 %v136
    %182 = vmatprep.subr.mxu0 %v139
    %183 = vmatpush1.msra.mxu0 %v138
    %184 = vmatprep.subr.mxu0 %v141
    %185 = vmatpush1.msra.mxu0 %v140
    %186 = vmatprep.subr.mxu0 %v143
    %187 = vmatpush1.msra.mxu0 %v142
    %188 = vmatprep.subr.mxu0 %v145
    %189 = vmatpush1.msra.mxu0 %v144
    %190 = vmatprep.subr.mxu0 %v147
    %191 = vmatpush1.msra.mxu0 %v146
    %192 = vmatprep.subr.mxu0 %v149
    %193 = vmatpush1.msra.mxu0 %v148
    %194 = vmatprep.subr.mxu0 %v151
    %195 = vmatpush1.msra.mxu0 %v150
    %196 = vmatprep.subr.mxu0 %v153
    %197 = vmatpush1.msra.mxu0 %v152
    %198 = vmatprep.subr.mxu0 %v155
    %199 = vmatpush1.msra.mxu0 %v154
    %200 = vmatprep.subr.mxu0 %v157
    %201 = vmatpush1.msra.mxu0 %v156
    %202 = vmatprep.subr.mxu0 %v159
    %203 = vmatpush1.msra.mxu0 %v158
    %204 = vmatprep.subr.mxu0 0.0
    %205 = vmatpush1.msra.mxu0 0.0
    %206 = vmatprep.subr.mxu0 0.0
    %207 = vmatpush1.msra.mxu0 0.0
    %208 = vmatprep.subr.mxu0 0.0
    %209 = vmatpush1.msra.mxu0 0.0
    %210 = vmatprep.subr.mxu0 0.0
    %211 = vmatpush1.msra.mxu0 0.0
    %212 = vmatprep.subr.mxu0 0.0
    %213 = vmatpush1.msra.mxu0 0.0
    %214 = vmatprep.subr.mxu0 0.0
    %215 = vmatpush1.msra.mxu0 0.0
    %216 = vmatprep.subr.mxu0 0.0
    %217 = vmatpush1.msra.mxu0 0.0
    %218 = vmatprep.subr.mxu0 0.0
    %219 = vmatpush1.msra.mxu0 0.0
    %220 = vmatprep.subr.mxu0 0.0
    %221 = vmatpush1.msra.mxu0 0.0
    %222 = vmatprep.subr.mxu0 0.0
    %223 = vmatpush1.msra.mxu0 0.0
    %224 = vmatprep.subr.mxu0 0.0
    %225 = vmatpush1.msra.mxu0 0.0
    %226 = vmatprep.subr.mxu0 0.0
    %227 = vmatpush1.msra.mxu0 0.0
    %228 = vmatprep.subr.mxu0 0.0
    %229 = vmatpush1.msra.mxu0 0.0
    %230 = vmatprep.subr.mxu0 0.0
    %231 = vmatpush1.msra.mxu0 0.0
    %232 = vmatprep.subr.mxu0 0.0
    %233 = vmatpush1.msra.mxu0 0.0
    %234 = vmatprep.subr.mxu0 0.0
    %235 = vmatpush1.msra.mxu0 0.0
    %236 = vmatprep.mubr.f32.mxu0 0.0
    %237 = vmatmul.mubr.f32.gmra.mrb[0].mxu0 %v126
    %v238 = vpop.f32.mrb[0].mxu0
    %v239 = vadd.f32 %v165, %v238
    %v240 = vpop.f32.mrb[0].mxu0
    %v241 = vadd.f32 %v169, %v240
    %242 = vmatprep.mubr.f32.mxu0 0.0
    %243 = vmatmul.mubr.f32.gmra.mrb[0].mxu0 %v127
    %v244 = vpop.f32.mrb[0].mxu0
    %v245 = vadd.f32 %v165, %v244
    %v246 = vpop.f32.mrb[0].mxu0
    %v247 = vadd.f32 %v169, %v246
    %248 = vdwg.mxu0
    %v249 = vmax.f32 %v239, 0.0
    %v250 = vmax.f32 %v241, 0.0
    %v251 = vmax.f32 %v245, 0.0
    %v252 = vmax.f32 %v247, 0.0
    %v253 = vld [vmem:[%s5] sm:$0xff]
    %v254 = vld [vmem:[%s5 + $0x8] sm:$0xff]
    %v255 = vld [vmem:[%s5 + $0x10] sm:$0xff]
    %v256 = vld [vmem:[%s5 + $0x18] sm:$0xff]
    %v257 = vld [vmem:[%s5 + $0x20] sm:$0xff]
    %v258 = vld [vmem:[%s5 + $0x28] sm:$0xff]
    %v259 = vld [vmem:[%s5 + $0x30] sm:$0xff]
    %v260 = vld [vmem:[%s5 + $0x38] sm:$0xff]
    %v261 = vld [vmem:[%s5 + $0x40] sm:$0xff]
    %v262 = vld [vmem:[%s5 + $0x48] sm:$0xff]
    %v263 = vld [vmem:[%s5 + $0x50] sm:$0xff]
    %v264 = vld [vmem:[%s5 + $0x58] sm:$0xff]
    %v265 = vld [vmem:[%s5 + $0x60] sm:$0xff]
    %v266 = vld [vmem:[%s5 + $0x68] sm:$0xff]
    %v267 = vld [vmem:[%s5 + $0x70] sm:$0xff]
    %v268 = vld [vmem:[%s5 + $0x78] sm:$0xff]
    %v269 = vld [vmem:[%s5 + $0x80] sm:$0xff]
    %v270 = vld [vmem:[%s5 + $0x88] sm:$0xff]
    %v271 = vld [vmem:[%s5 + $0x90] sm:$0xff]
    %v272 = vld [vmem:[%s5 + $0x98] sm:$0xff]
    %v273 = vld [vmem:[%s5 + $0xa0] sm:$0xff]
    %v274 = vld [vmem:[%s5 + $0xa8] sm:$0xff]
    %v275 = vld [vmem:[%s5 + $0xb0] sm:$0xff]
    %v276 = vld [vmem:[%s5 + $0xb8] sm:$0xff]
    %v277 = vld [vmem:[%s5 + $0xc0] sm:$0xff]
    %v278 = vld [vmem:[%s5 + $0xc8] sm:$0xff]
    %v279 = vld [vmem:[%s5 + $0xd0] sm:$0xff]
    %v280 = vld [vmem:[%s5 + $0xd8] sm:$0xff]
    %v281 = vld [vmem:[%s5 + $0xe0] sm:$0xff]
    %v282 = vld [vmem:[%s5 + $0xe8] sm:$0xff]
    %v283 = vld [vmem:[%s5 + $0xf0] sm:$0xff]
    %v284 = vld [vmem:[%s5 + $0xf8] sm:$0xff]
    %v285 = vld [vmem:[%s6] sm:$0x1]
    %v287 = vlaneseq
    %v288 = vshrl.u32 %v287, 7
    %v289 = vsub.s32 0, %v288
    %v290 = vrot.slane %v285, %v289
    %292 = vmatprep.subr.mxu0 0.0
    %293 = vmatpush1.msra.mxu0 %v253
    %294 = vmatprep.subr.mxu0 0.0
    %295 = vmatpush1.msra.mxu0 %v254
    %296 = vmatprep.subr.mxu0 0.0
    %297 = vmatpush1.msra.mxu0 %v255
    %298 = vmatprep.subr.mxu0 0.0
    %299 = vmatpush1.msra.mxu0 %v256
    %300 = vmatprep.subr.mxu0 0.0
    %301 = vmatpush1.msra.mxu0 %v257
    %302 = vmatprep.subr.mxu0 0.0
    %303 = vmatpush1.msra.mxu0 %v258
    %304 = vmatprep.subr.mxu0 0.0
    %305 = vmatpush1.msra.mxu0 %v259
    %306 = vmatprep.subr.mxu0 0.0
    %307 = vmatpush1.msra.mxu0 %v260
    %308 = vmatprep.subr.mxu0 0.0
    %309 = vmatpush1.msra.mxu0 %v261
    %310 = vmatprep.subr.mxu0 0.0
    %311 = vmatpush1.msra.mxu0 %v262
    %312 = vmatprep.subr.mxu0 0.0
    %313 = vmatpush1.msra.mxu0 %v263
    %314 = vmatprep.subr.mxu0 0.0
    %315 = vmatpush1.msra.mxu0 %v264
    %316 = vmatprep.subr.mxu0 0.0
    %317 = vmatpush1.msra.mxu0 %v265
    %318 = vmatprep.subr.mxu0 0.0
    %319 = vmatpush1.msra.mxu0 %v266
    %320 = vmatprep.subr.mxu0 0.0
    %321 = vmatpush1.msra.mxu0 %v267
    %322 = vmatprep.subr.mxu0 0.0
    %323 = vmatpush1.msra.mxu0 %v268
    %324 = vmatprep.subr.mxu0 0.0
    %325 = vmatpush1.msra.mxu0 %v269
    %326 = vmatprep.subr.mxu0 0.0
    %327 = vmatpush1.msra.mxu0 %v270
    %328 = vmatprep.subr.mxu0 0.0
    %329 = vmatpush1.msra.mxu0 %v271
    %330 = vmatprep.subr.mxu0 0.0
    %331 = vmatpush1.msra.mxu0 %v272
    %332 = vmatprep.subr.mxu0 0.0
    %333 = vmatpush1.msra.mxu0 %v273
    %334 = vmatprep.subr.mxu0 0.0
    %335 = vmatpush1.msra.mxu0 %v274
    %336 = vmatprep.subr.mxu0 0.0
    %337 = vmatpush1.msra.mxu0 %v275
    %338 = vmatprep.subr.mxu0 0.0
    %339 = vmatpush1.msra.mxu0 %v276
    %340 = vmatprep.subr.mxu0 0.0
    %341 = vmatpush1.msra.mxu0 %v277
    %342 = vmatprep.subr.mxu0 0.0
    %343 = vmatpush1.msra.mxu0 %v278
    %344 = vmatprep.subr.mxu0 0.0
    %345 = vmatpush1.msra.mxu0 %v279
    %346 = vmatprep.subr.mxu0 0.0
    %347 = vmatpush1.msra.mxu0 %v280
    %348 = vmatprep.subr.mxu0 0.0
    %349 = vmatpush1.msra.mxu0 %v281
    %350 = vmatprep.subr.mxu0 0.0
    %351 = vmatpush1.msra.mxu0 %v282
    %352 = vmatprep.subr.mxu0 0.0
    %353 = vmatpush1.msra.mxu0 %v283
    %354 = vmatprep.subr.mxu0 0.0
    %355 = vmatpush1.msra.mxu0 %v284
    %356 = vmatprep.mubr.f32.mxu0 %v250
    %357 = vmatmul.mubr.f32.gmra.mrb[0].mxu0 %v249
    %v358 = vpop.f32.mrb[0].mxu0
    %v359 = vadd.f32 %v290, %v358
    %v360 = vpop.f32.mrb[0].mxu0
    %361 = vmatprep.mubr.f32.mxu0 %v252
    %362 = vmatmul.mubr.f32.gmra.mrb[0].mxu0 %v251
    %v363 = vpop.f32.mrb[0].mxu0
    %v364 = vadd.f32 %v290, %v363
    %v365 = vpop.f32.mrb[0].mxu0
    %366 = vdwg.mxu0
    %v367 = vmax.f32 %v359, 0.0
    %v368 = vmax.f32 %v364, 0.0
    %v369 = vld [vmem:[%s7] sm:$0xff]
    %v370 = vld [vmem:[%s7 + $0x8] sm:$0xff]
    %v371 = vld [vmem:[%s7 + $0x10] sm:$0xff]
    %v372 = vld [vmem:[%s7 + $0x18] sm:$0xff]
    %v373 = vld [vmem:[%s7 + $0x20] sm:$0xff]
    %v374 = vld [vmem:[%s7 + $0x28] sm:$0xff]
    %v375 = vld [vmem:[%s7 + $0x30] sm:$0xff]
    %v376 = vld [vmem:[%s7 + $0x38] sm:$0xff]
    %v377 = vld [vmem:[%s8] sm:$0x1]
    %v379 = vlaneseq
    %v380 = vshrl.u32 %v379, 7
    %v381 = vsub.s32 0, %v380
    %v382 = vrot.slane %v377, %v381
    %vm384 = vcmask 523264
    %v386 = vsel %vm384, %v367, 0
    %v389 = vsel %vm384, %v368, 0
    %391 = vmatprep.subr.mxu0 0.0
    %392 = vmatpush1.msra.mxu0 %v369
    %393 = vmatprep.subr.mxu0 0.0
    %394 = vmatpush1.msra.mxu0 %v370
    %395 = vmatprep.subr.mxu0 0.0
    %396 = vmatpush1.msra.mxu0 %v371
    %397 = vmatprep.subr.mxu0 0.0
    %398 = vmatpush1.msra.mxu0 %v372
    %399 = vmatprep.subr.mxu0 0.0
    %400 = vmatpush1.msra.mxu0 %v373
    %401 = vmatprep.subr.mxu0 0.0
    %402 = vmatpush1.msra.mxu0 %v374
    %403 = vmatprep.subr.mxu0 0.0
    %404 = vmatpush1.msra.mxu0 %v375
    %405 = vmatprep.subr.mxu0 0.0
    %406 = vmatpush1.msra.mxu0 %v376
    %407 = vmatprep.subr.mxu0 0.0
    %408 = vmatpush1.msra.mxu0 0.0
    %409 = vmatprep.subr.mxu0 0.0
    %410 = vmatpush1.msra.mxu0 0.0
    %411 = vmatprep.subr.mxu0 0.0
    %412 = vmatpush1.msra.mxu0 0.0
    %413 = vmatprep.subr.mxu0 0.0
    %414 = vmatpush1.msra.mxu0 0.0
    %415 = vmatprep.subr.mxu0 0.0
    %416 = vmatpush1.msra.mxu0 0.0
    %417 = vmatprep.subr.mxu0 0.0
    %418 = vmatpush1.msra.mxu0 0.0
    %419 = vmatprep.subr.mxu0 0.0
    %420 = vmatpush1.msra.mxu0 0.0
    %421 = vmatprep.subr.mxu0 0.0
    %422 = vmatpush1.msra.mxu0 0.0
    %423 = vmatprep.subr.mxu0 0.0
    %424 = vmatpush1.msra.mxu0 0.0
    %425 = vmatprep.subr.mxu0 0.0
    %426 = vmatpush1.msra.mxu0 0.0
    %427 = vmatprep.subr.mxu0 0.0
    %428 = vmatpush1.msra.mxu0 0.0
    %429 = vmatprep.subr.mxu0 0.0
    %430 = vmatpush1.msra.mxu0 0.0
    %431 = vmatprep.subr.mxu0 0.0
    %432 = vmatpush1.msra.mxu0 0.0
    %433 = vmatprep.subr.mxu0 0.0
    %434 = vmatpush1.msra.mxu0 0.0
    %435 = vmatprep.subr.mxu0 0.0
    %436 = vmatpush1.msra.mxu0 0.0
    %437 = vmatprep.subr.mxu0 0.0
    %438 = vmatpush1.msra.mxu0 0.0
    %439 = vmatprep.subr.mxu0 0.0
    %440 = vmatpush1.msra.mxu0 0.0
    %441 = vmatprep.subr.mxu0 0.0
    %442 = vmatpush1.msra.mxu0 0.0
    %443 = vmatprep.subr.mxu0 0.0
    %444 = vmatpush1.msra.mxu0 0.0
    %445 = vmatprep.subr.mxu0 0.0
    %446 = vmatpush1.msra.mxu0 0.0
    %447 = vmatprep.subr.mxu0 0.0
    %448 = vmatpush1.msra.mxu0 0.0
    %449 = vmatprep.subr.mxu0 0.0
    %450 = vmatpush1.msra.mxu0 0.0
    %451 = vmatprep.subr.mxu0 0.0
    %452 = vmatpush1.msra.mxu0 0.0
    %453 = vmatprep.subr.mxu0 0.0
    %454 = vmatpush1.msra.mxu0 0.0
    %455 = vmatprep.mubr.f32.mxu0 0.0
    %456 = vmatmul.mubr.f32.gmra.mrb[0].mxu0 %v386
    %v457 = vpop.f32.mrb[0].mxu0
    %v458 = vadd.f32 %v382, %v457
    %v459 = vpop.f32.mrb[0].mxu0
    %460 = vmatprep.mubr.f32.mxu0 0.0
    %461 = vmatmul.mubr.f32.gmra.mrb[0].mxu0 %v389
    %v462 = vpop.f32.mrb[0].mxu0
    %v463 = vadd.f32 %v382, %v462
    %v464 = vpop.f32.mrb[0].mxu0
    %465 = vdwg.mxu0
    %466 = vst [vmem:[#allocation2] sm:$0xff] %v458
    %467 = vst [vmem:[#allocation2 + $0x8] sm:$0xff] %v463
    // Predicated region
    $region38: #{tpu_custom_call.1} parent=1 // pred_check
      _
    $region39: #{tpu_custom_call.1} parent=1 // pred_check_branch
      %469 = sbr.rel (0) target = $region41
    $region40: #{tpu_custom_call.1} parent=1 // pred_region
      %s471 = ssub.s32 256, 256
      %472 = vsyncadd [#allocation3], %s471
      %s473 = sshll.u32 [#allocation2], 4
      %s474 = int_to_ptr.vmem [resolvable:$true] %s473
      %479 = dma.vmem_to_hbm [thread:$0]  %s474, 256, %s9, [#allocation3], 128, 128, 8
    $region41: #{tpu_custom_call.1} parent=1 // pred_fallthru
      _
    // Predicated region
    $region42: #{tpu_custom_call.1} parent=1 // pred_check
      _
    $region43: #{tpu_custom_call.1} parent=1 // pred_check_branch
      %481 = sbr.rel (0) target = $region45
    $region44: #{tpu_custom_call.1} parent=1 // pred_region
      %482 = dma.done [#allocation3], 256
    $region45: #{tpu_custom_call.1} parent=1 // pred_fallthru
      _
    %483 = vsyncpa [#allocation3], 1

</llo_original>
